<compile_context>
chip_gen: v6e
topology: v6e:2x2x1
jax: 0.10.0
libtpu: 0.0.40
codegen_flags: <defaults>
</compile_context>

<pallas_src>
import jax
import jax.numpy as jnp
import numpy as np
from jax import lax
from jax.experimental import pallas as pl
from jax.experimental.pallas import tpu as pltpu


def _round_up(x, m):
    return (x + m - 1) // m * m


# ---------------------------------------------------------------------------
# Pallas kernel: out = relu(W @ patches + b), lane-dense (C_out, tile_m) block.
# ---------------------------------------------------------------------------
def _matmul_bias_relu_kernel(x_ref, w_ref, b_ref, o_ref):
    acc = jnp.dot(w_ref[...], x_ref[...], preferred_element_type=jnp.float32)
    o_ref[...] = jnp.maximum(acc + b_ref[...], 0.0)


def matmul_bias_relu(patches_t, w_flat, b_col, *, tile_m=2048):
    """relu(w_flat @ patches_t + b_col).

    patches_t: (K, M)      im2col patches, pixels on the lane axis.
    w_flat:    (C_out, K)  conv weight (BN folded), K-order = (cin, ky, kx).
    b_col:     (C_out, 1)  folded bias.
    returns    (C_out, M)
    """
    k_dim, m = patches_t.shape
    c_out = w_flat.shape[0]

    tile = min(_round_up(tile_m, 128), _round_up(m, 128))   # multiple of 128
    mp = _round_up(m, tile)
    if mp != m:
        patches_t = jnp.pad(patches_t, ((0, 0), (0, mp - m)))

    out = pl.pallas_call(
        _matmul_bias_relu_kernel,
        out_shape=jax.ShapeDtypeStruct((c_out, mp), jnp.float32),
        grid=(mp // tile,),
        in_specs=[
            pl.BlockSpec((k_dim, tile), lambda i: (0, i)),
            pl.BlockSpec((c_out, k_dim), lambda i: (0, 0)),
            pl.BlockSpec((c_out, 1), lambda i: (0, 0)),
        ],
        out_specs=pl.BlockSpec((c_out, tile), lambda i: (0, i)),
        compiler_params=pltpu.CompilerParams(dimension_semantics=("parallel",)),
    )(patches_t, w_flat, b_col)
    return out[:, :m]


# ---------------------------------------------------------------------------
# Wrapper-side layout plumbing: maxpool + im2col (pixels on the lane axis).
# ---------------------------------------------------------------------------
def maxpool2x2(x):
    """x: (N, C, H, W) -> (N, C, H//2, W//2), matching nn.MaxPool2d(2)."""
    n, c, h, w = x.shape
    hp, wp = h // 2, w // 2
    x = x[:, :, : hp * 2, : wp * 2]
    return x.reshape(n, c, hp, 2, wp, 2).max(axis=(3, 5))


def im2col_3x3(x):
    """x: (N, C, H, W) -> (9*C, N*H*W) patches for a 3x3 conv with padding=1.

    K index order is (c, ky, kx) -> matches torch Conv2d weight.reshape(O, C*9);
    pixel index order is (n, y, x) row-major.
    """
    n, c, h, w = x.shape
    xpad = jnp.pad(x, ((0, 0), (0, 0), (1, 1), (1, 1)))
    taps = [xpad[:, :, ky:ky + h, kx:kx + w] for ky in range(3) for kx in range(3)]
    patches = jnp.stack(taps, axis=2)                         # (N, C, 9, H, W)
    return patches.transpose(1, 2, 0, 3, 4).reshape(c * 9, n * h * w)


def down_forward(params, x, *, tile_m=2048):
    """`Down` forward pass. x: (N, Cin, H, W) NCHW -> (N, Cout, H//2, W//2)."""
    x = x.astype(jnp.float32)
    n = x.shape[0]
    pooled = maxpool2x2(x)                                    # (N, Cin, Hp, Wp)
    hp, wp = pooled.shape[2], pooled.shape[3]

    # conv1 + BN + ReLU: single K = 9*Cin matmul.
    p1 = im2col_3x3(pooled)                                   # (9*Cin, M)
    h1 = matmul_bias_relu(p1, params["w1"], params["b1"], tile_m=tile_m)  # (O, M)

    # conv2 + BN + ReLU: single K = 9*O matmul.
    o = h1.shape[0]
    h1_sp = h1.reshape(o, n, hp, wp).transpose(1, 0, 2, 3)    # (N, O, Hp, Wp)
    p2 = im2col_3x3(h1_sp)                                    # (9*O, M)
    h2 = matmul_bias_relu(p2, params["w2"], params["b2"], tile_m=tile_m)  # (O, M)

    return h2.reshape(o, n, hp, wp).transpose(1, 0, 2, 3)     # (N, O, Hp, Wp)


# ---------------------------------------------------------------------------
# Deterministic parameters + BN folding (eval-mode running stats).
# ---------------------------------------------------------------------------
def make_raw_params(key, cin, cout):
    keys = iter(jax.random.split(key, 16))

    def nrm(shape, scale=0.1):
        return scale * jax.random.normal(next(keys), shape, dtype=jnp.float32)

    p = {}
    p["conv1_w"] = nrm((cout, cin, 3, 3))
    p["conv1_b"] = nrm((cout,))
    p["bn1_gamma"] = 1.0 + nrm((cout,))
    p["bn1_beta"] = nrm((cout,))
    p["bn1_mean"] = nrm((cout,))
    p["bn1_var"] = 1.0 + jnp.abs(nrm((cout,)))
    p["conv2_w"] = nrm((cout, cout, 3, 3))
    p["conv2_b"] = nrm((cout,))
    p["bn2_gamma"] = 1.0 + nrm((cout,))
    p["bn2_beta"] = nrm((cout,))
    p["bn2_mean"] = nrm((cout,))
    p["bn2_var"] = 1.0 + jnp.abs(nrm((cout,)))
    return p


def fold_params(raw, eps=1e-5):
    def fold(w, b, gamma, beta, mean, var):
        scale = gamma / jnp.sqrt(var + eps)                    # (O,)
        cout = w.shape[0]
        w_f = (w * scale[:, None, None, None]).reshape(cout, -1)   # (O, Cin*9)
        b_f = ((b - mean) * scale + beta)[:, None]                  # (O, 1)
        return w_f, b_f

    w1, b1 = fold(raw["conv1_w"], raw["conv1_b"], raw["bn1_gamma"],
                  raw["bn1_beta"], raw["bn1_mean"], raw["bn1_var"])
    w2, b2 = fold(raw["conv2_w"], raw["conv2_b"], raw["bn2_gamma"],
                  raw["bn2_beta"], raw["bn2_mean"], raw["bn2_var"])
    return {"w1": w1, "b1": b1, "w2": w2, "b2": b2}


# ---------------------------------------------------------------------------
# Pure-JAX reference (eval-mode BN) for a correctness sanity check.
# ---------------------------------------------------------------------------
def down_reference(raw, x, eps=1e-5):
    x = x.astype(jnp.float32)
    pooled = lax.reduce_window(x, -jnp.inf, lax.max,
                               (1, 1, 2, 2), (1, 1, 2, 2), "VALID")

    def conv_bn_relu(y, w, b, gamma, beta, mean, var):
        y = lax.conv_general_dilated(
            y, w, window_strides=(1, 1), padding=((1, 1), (1, 1)),
            dimension_numbers=("NCHW", "OIHW", "NCHW"),
            precision=lax.Precision.HIGHEST)
        y = y + b[None, :, None, None]
        y = (y - mean[None, :, None, None]) / jnp.sqrt(var[None, :, None, None] + eps)
        y = gamma[None, :, None, None] * y + beta[None, :, None, None]
        return jnp.maximum(y, 0.0)

    h = conv_bn_relu(pooled, raw["conv1_w"], raw["conv1_b"], raw["bn1_gamma"],
                     raw["bn1_beta"], raw["bn1_mean"], raw["bn1_var"])
    return conv_bn_relu(h, raw["conv2_w"], raw["conv2_b"], raw["bn2_gamma"],
                        raw["bn2_beta"], raw["bn2_mean"], raw["bn2_var"])


if __name__ == "__main__":
    N, C_IN, C_OUT = 2, 4, 8
    H, W = 16, 16

    key = jax.random.PRNGKey(0)
    kx, kp = jax.random.split(key)
    x = jax.random.normal(kx, (N, C_IN, H, W), dtype=jnp.float32)

    raw = make_raw_params(kp, C_IN, C_OUT)
    params = fold_params(raw)

    y = jax.jit(down_forward)(params, x)
    jax.block_until_ready(y)
    assert y.shape == (N, C_OUT, H // 2, W // 2), y.shape

    y_ref = down_reference(raw, x)
    np.testing.assert_allclose(np.asarray(y), np.asarray(y_ref),
                               rtol=5e-2, atol=5e-2)

    print("KERNEL_OK")
</pallas_src>

<mosaic_0001>
module attributes {stable_mosaic.version = 11 : i64} {
  func.func @_matmul_bias_relu_kernel(%arg0: i32, %arg1: memref<36x128xf32, #tpu.memory_space<vmem>>, %arg2: memref<8x36xf32, #tpu.memory_space<vmem>>, %arg3: memref<8x1xf32, #tpu.memory_space<vmem>>, %arg4: memref<8x128xf32, #tpu.memory_space<vmem>>) attributes {dimension_semantics = [#tpu.dimension_semantics<parallel>], iteration_bounds = array<i64: 1>, scalar_prefetch = 0 : i64, scratch_operands = 0 : i64, tpu.core_type = #tpu.core_type<tc>, window_params = [{transform_indices = @transform_0, window_bounds = array<i64: 36, 128>}, {pipeline_mode = #tpu.pipeline_mode<synchronous>, transform_indices = @transform_1, window_bounds = array<i64: 8, 36>}, {pipeline_mode = #tpu.pipeline_mode<synchronous>, transform_indices = @transform_2, window_bounds = array<i64: 8, 1>}, {transform_indices = @transform_3, window_bounds = array<i64: 8, 128>}]} {
    %c0 = arith.constant 0 : index
    %c0_0 = arith.constant 0 : index
    %0 = vector.load %arg2[%c0, %c0_0] : memref<8x36xf32, #tpu.memory_space<vmem>>, vector<8x36xf32>
    %c0_1 = arith.constant 0 : index
    %c0_2 = arith.constant 0 : index
    %1 = vector.load %arg1[%c0_1, %c0_2] : memref<36x128xf32, #tpu.memory_space<vmem>>, vector<36x128xf32>
    %cst = arith.constant dense<0.000000e+00> : vector<8x128xf32>
    %2 = tpu.matmul %0, %1, %cst {dimension_numbers = #tpu.dot_dimension_numbers<[1], [0], [0], [1], [0, 0, 1, 1], [], []>} : vector<8x36xf32>, vector<36x128xf32>, vector<8x128xf32> -> vector<8x128xf32>
    %c0_3 = arith.constant 0 : index
    %c0_4 = arith.constant 0 : index
    %3 = vector.load %arg3[%c0_3, %c0_4] : memref<8x1xf32, #tpu.memory_space<vmem>>, vector<8x1xf32>
    %4 = vector.broadcast %3 : vector<8x1xf32> to vector<8x128xf32>
    %5 = arith.addf %2, %4 : vector<8x128xf32>
    %cst_5 = arith.constant 0.000000e+00 : f32
    %6 = vector.broadcast %cst_5 : f32 to vector<8x128xf32>
    %7 = arith.maximumf %5, %6 : vector<8x128xf32>
    %c0_6 = arith.constant 0 : index
    %c0_7 = arith.constant 0 : index
    %8 = vector.load %arg4[%c0_6, %c0_7] : memref<8x128xf32, #tpu.memory_space<vmem>>, vector<8x128xf32>
    tpu.vector_store %arg4[%c0_6, %c0_7], %7 {strides = array<i32>} : memref<8x128xf32, #tpu.memory_space<vmem>>, vector<8x128xf32>,
    return
  }
  func.func @transform_0(%arg0: i32) -> (i32, i32) {
    %c0_i32 = arith.constant 0 : i32
    %c0_i32_0 = arith.constant 0 : i32
    return %c0_i32, %arg0 : i32, i32
  }
  func.func @transform_1(%arg0: i32) -> (i32, i32) {
    %c0_i32 = arith.constant 0 : i32
    %c0_i32_0 = arith.constant 0 : i32
    %c0_i32_1 = arith.constant 0 : i32
    return %c0_i32, %c0_i32_0 : i32, i32
  }
  func.func @transform_2(%arg0: i32) -> (i32, i32) {
    %c0_i32 = arith.constant 0 : i32
    %c0_i32_0 = arith.constant 0 : i32
    %c0_i32_1 = arith.constant 0 : i32
    return %c0_i32, %c0_i32_0 : i32, i32
  }
  func.func @transform_3(%arg0: i32) -> (i32, i32) {
    %c0_i32 = arith.constant 0 : i32
    %c0_i32_0 = arith.constant 0 : i32
    return %c0_i32, %arg0 : i32, i32
  }
}

module attributes {stable_mosaic.version = 11 : i64} {
  func.func @_matmul_bias_relu_kernel(%arg0: i32, %arg1: memref<72x128xf32, #tpu.memory_space<vmem>>, %arg2: memref<8x72xf32, #tpu.memory_space<vmem>>, %arg3: memref<8x1xf32, #tpu.memory_space<vmem>>, %arg4: memref<8x128xf32, #tpu.memory_space<vmem>>) attributes {dimension_semantics = [#tpu.dimension_semantics<parallel>], iteration_bounds = array<i64: 1>, scalar_prefetch = 0 : i64, scratch_operands = 0 : i64, tpu.core_type = #tpu.core_type<tc>, window_params = [{transform_indices = @transform_0, window_bounds = array<i64: 72, 128>}, {pipeline_mode = #tpu.pipeline_mode<synchronous>, transform_indices = @transform_1, window_bounds = array<i64: 8, 72>}, {pipeline_mode = #tpu.pipeline_mode<synchronous>, transform_indices = @transform_2, window_bounds = array<i64: 8, 1>}, {transform_indices = @transform_3, window_bounds = array<i64: 8, 128>}]} {
    %c0 = arith.constant 0 : index
    %c0_0 = arith.constant 0 : index
    %0 = vector.load %arg2[%c0, %c0_0] : memref<8x72xf32, #tpu.memory_space<vmem>>, vector<8x72xf32>
    %c0_1 = arith.constant 0 : index
    %c0_2 = arith.constant 0 : index
    %1 = vector.load %arg1[%c0_1, %c0_2] : memref<72x128xf32, #tpu.memory_space<vmem>>, vector<72x128xf32>
    %cst = arith.constant dense<0.000000e+00> : vector<8x128xf32>
    %2 = tpu.matmul %0, %1, %cst {dimension_numbers = #tpu.dot_dimension_numbers<[1], [0], [0], [1], [0, 0, 1, 1], [], []>} : vector<8x72xf32>, vector<72x128xf32>, vector<8x128xf32> -> vector<8x128xf32>
    %c0_3 = arith.constant 0 : index
    %c0_4 = arith.constant 0 : index
    %3 = vector.load %arg3[%c0_3, %c0_4] : memref<8x1xf32, #tpu.memory_space<vmem>>, vector<8x1xf32>
    %4 = vector.broadcast %3 : vector<8x1xf32> to vector<8x128xf32>
    %5 = arith.addf %2, %4 : vector<8x128xf32>
    %cst_5 = arith.constant 0.000000e+00 : f32
    %6 = vector.broadcast %cst_5 : f32 to vector<8x128xf32>
    %7 = arith.maximumf %5, %6 : vector<8x128xf32>
    %c0_6 = arith.constant 0 : index
    %c0_7 = arith.constant 0 : index
    %8 = vector.load %arg4[%c0_6, %c0_7] : memref<8x128xf32, #tpu.memory_space<vmem>>, vector<8x128xf32>
    tpu.vector_store %arg4[%c0_6, %c0_7], %7 {strides = array<i32>} : memref<8x128xf32, #tpu.memory_space<vmem>>, vector<8x128xf32>,
    return
  }
  func.func @transform_0(%arg0: i32) -> (i32, i32) {
    %c0_i32 = arith.constant 0 : i32
    %c0_i32_0 = arith.constant 0 : i32
    return %c0_i32, %arg0 : i32, i32
  }
  func.func @transform_1(%arg0: i32) -> (i32, i32) {
    %c0_i32 = arith.constant 0 : i32
    %c0_i32_0 = arith.constant 0 : i32
    %c0_i32_1 = arith.constant 0 : i32
    return %c0_i32, %c0_i32_0 : i32, i32
  }
  func.func @transform_2(%arg0: i32) -> (i32, i32) {
    %c0_i32 = arith.constant 0 : i32
    %c0_i32_0 = arith.constant 0 : i32
    %c0_i32_1 = arith.constant 0 : i32
    return %c0_i32, %c0_i32_0 : i32, i32
  }
  func.func @transform_3(%arg0: i32) -> (i32, i32) {
    %c0_i32 = arith.constant 0 : i32
    %c0_i32_0 = arith.constant 0 : i32
    return %c0_i32, %arg0 : i32, i32
  }
}

</mosaic_0001>

<llo_original>
// kernel: down_forward.2
$region0: #{down_forward.2}
  #allocation0 [shape = 'u32[]', space=smem, size = 0x4, offset = 0x4, fixed_abs, tag = 'smem constant byte address 0x4 - core index']
  #allocation1 [shape = 'u32[144,128]{1,0:T(1,128)}', space=vmem, size = 0x12000, scoped, tag = 'internal scratch']
  %s0 = inlined_call_operand.vmem [shape: f32[36,128], index: 0, kind: input, shape index: {}]
  %s1 = inlined_call_operand.vmem [shape: f32[8,36], index: 1, kind: input, shape index: {}]
  %s2 = inlined_call_operand.vmem [shape: f32[8,1], index: 2, kind: input, shape index: {}]
  %s3 = inlined_call_operand.vmem [shape: f32[8,128], index: 3, kind: output, shape index: {}]
  %s4 = sld [smem:[#allocation0]]
  $region22: #{down_forward.2} parent=0
    _
  %s6 = ssub.s32 1, %s4
  %s7 = scalar_select 0, %s6, %s4
  // Predicated region
  $region2: #{down_forward.2} parent=0 // pred_check
    _
  $region3: #{down_forward.2} parent=0 // pred_check_branch
    %9 = sbr.rel (0) target = $region5
  $region4: #{down_forward.2} parent=0 // pred_region
    _
  $region5: #{down_forward.2} parent=0 // pred_fallthru
    _
  // Predicated region
  $region6: #{down_forward.2} parent=0 // pred_check
    _
  $region7: #{down_forward.2} parent=0 // pred_check_branch
    %11 = sbr.rel (0) target = $region9
  $region8: #{down_forward.2} parent=0 // pred_region
    _
  $region9: #{down_forward.2} parent=0 // pred_fallthru
    _
  // Predicated region
  $region10: #{down_forward.2} parent=0 // pred_check
    _
  $region11: #{down_forward.2} parent=0 // pred_check_branch
    %13 = sbr.rel (0) target = $region13
  $region12: #{down_forward.2} parent=0 // pred_region
    _
  $region13: #{down_forward.2} parent=0 // pred_fallthru
    _
  %v14 = vld [vmem:[%s1] sm:$0xff]
  %v15 = vld [vmem:[%s0] sm:$0xff]
  %v16 = vld [vmem:[%s0 + $0x8] sm:$0xff]
  %v17 = vld [vmem:[%s0 + $0x10] sm:$0xff]
  %v18 = vld [vmem:[%s0 + $0x18] sm:$0xff]
  %v19 = vld [vmem:[%s0 + $0x20] sm:$0xf]
  %v20 = vld [vmem:[%s2] sm:$0xff]
  %22 = vset.pattern.permute.xlu0 0
  %23 = vperm.xlu0 %22, %v20
  %v24 = vpop.permute.xlu0 %23
  %vm26 = vcmask 293888
  %v28 = vsel %vm26, %v14, 0
  %vm30 = vcmask 1043456
  %v32 = vsel %vm30, %v19, 0
  %34 = vmatprep.subr.mxu0 0.0
  %35 = vmatpush1.msra.mxu0 0.0
  %36 = vmatprep.subr.mxu0 0.0
  %37 = vmatpush1.msra.mxu0 0.0
  %38 = vmatprep.subr.mxu0 0.0
  %39 = vmatpush1.msra.mxu0 0.0
  %40 = vmatprep.subr.mxu0 0.0
  %41 = vmatpush1.msra.mxu0 0.0
  %42 = vmatprep.subr.mxu0 0.0
  %43 = vmatpush1.msra.mxu0 0.0
  %44 = vmatprep.subr.mxu0 0.0
  %45 = vmatpush1.msra.mxu0 0.0
  %46 = vmatprep.subr.mxu0 0.0
  %47 = vmatpush1.msra.mxu0 0.0
  %48 = vmatprep.subr.mxu0 0.0
  %49 = vmatpush1.msra.mxu0 0.0
  %50 = vmatprep.subr.mxu0 0.0
  %51 = vmatpush1.msra.mxu0 0.0
  %52 = vmatprep.subr.mxu0 0.0
  %53 = vmatpush1.msra.mxu0 0.0
  %54 = vmatprep.subr.mxu0 0.0
  %55 = vmatpush1.msra.mxu0 0.0
  %56 = vmatprep.subr.mxu0 0.0
  %57 = vmatpush1.msra.mxu0 %v32
  %58 = vmatprep.subr.mxu0 0.0
  %59 = vmatpush1.msra.mxu0 %v18
  %60 = vmatprep.subr.mxu0 0.0
  %61 = vmatpush1.msra.mxu0 %v17
  %62 = vmatprep.subr.mxu0 0.0
  %63 = vmatpush1.msra.mxu0 %v16
  %64 = vmatprep.subr.mxu0 0.0
  %65 = vmatpush1.msra.mxu0 %v15
  %66 = vmatprep.subr.mxu0 0.0
  %67 = vmatpush2.msra.mxu0 0.0
  %68 = vmatprep.subr.mxu0 0.0
  %69 = vmatpush2.msra.mxu0 0.0
  %70 = vmatprep.subr.mxu0 0.0
  %71 = vmatpush2.msra.mxu0 0.0
  %72 = vmatprep.subr.mxu0 0.0
  %73 = vmatpush2.msra.mxu0 0.0
  %74 = vmatprep.subr.mxu0 0.0
  %75 = vmatpush2.msra.mxu0 0.0
  %76 = vmatprep.subr.mxu0 0.0
  %77 = vmatpush2.msra.mxu0 0.0
  %78 = vmatprep.subr.mxu0 0.0
  %79 = vmatpush2.msra.mxu0 0.0
  %80 = vmatprep.subr.mxu0 0.0
  %81 = vmatpush2.msra.mxu0 0.0
  %82 = vmatprep.subr.mxu0 0.0
  %83 = vmatpush2.msra.mxu0 0.0
  %84 = vmatprep.subr.mxu0 0.0
  %85 = vmatpush2.msra.mxu0 0.0
  %86 = vmatprep.subr.mxu0 0.0
  %87 = vmatpush2.msra.mxu0 0.0
  %88 = vmatprep.subr.mxu0 0.0
  %89 = vmatpush2.msra.mxu0 0.0
  %90 = vmatprep.subr.mxu0 0.0
  %91 = vmatpush2.msra.mxu0 0.0
  %92 = vmatprep.subr.mxu0 0.0
  %93 = vmatpush2.msra.mxu0 0.0
  %94 = vmatprep.subr.mxu0 0.0
  %95 = vmatpush2.msra.mxu0 0.0
  %96 = vmatprep.subr.mxu0 0.0
  %97 = vmatpush2.msra.mxu0 0.0
  %98 = vmatprep.mubr.f32.mxu0 0.0
  %99 = vmatmul.mubr.f32.gmra.mxu0 %v28
  %v100 = vpop.f32.mrf.mxu0
  %v101 = vadd.f32 %v24, %v100
  %v102 = vpop.f32.mrf.mxu0
  %103 = vdwg.mxu0
  %v104 = vmax.f32 %v101, 0.0
  %105 = vst [vmem:[%s3] sm:$0xff] %v104
  // Predicated region
  $region14: #{down_forward.2} parent=0 // pred_check
    _
  $region15: #{down_forward.2} parent=0 // pred_check_branch
    %107 = sbr.rel (0) target = $region17
  $region16: #{down_forward.2} parent=0 // pred_region
    _
  $region17: #{down_forward.2} parent=0 // pred_fallthru
    _
  // Predicated region
  $region18: #{down_forward.2} parent=0 // pred_check
    _
  $region19: #{down_forward.2} parent=0 // pred_check_branch
    %109 = sbr.rel (0) target = $region21
  $region20: #{down_forward.2} parent=0 // pred_region
    _
  $region21: #{down_forward.2} parent=0 // pred_fallthru
    _

// kernel: down_forward.3
$region0: #{down_forward.3}
  #allocation0 [shape = 'u32[]', space=smem, size = 0x4, offset = 0x4, fixed_abs, tag = 'smem constant byte address 0x4 - core index']
  #allocation1 [shape = 'u32[144,128]{1,0:T(1,128)}', space=vmem, size = 0x12000, scoped, tag = 'internal scratch']
  %s0 = inlined_call_operand.vmem [shape: f32[72,128], index: 0, kind: input, shape index: {}]
  %s1 = inlined_call_operand.vmem [shape: f32[8,72], index: 1, kind: input, shape index: {}]
  %s2 = inlined_call_operand.vmem [shape: f32[8,1], index: 2, kind: input, shape index: {}]
  %s3 = inlined_call_operand.vmem [shape: f32[8,128], index: 3, kind: output, shape index: {}]
  %s4 = sld [smem:[#allocation0]]
  $region22: #{down_forward.3} parent=0
    _
  %s6 = ssub.s32 1, %s4
  %s7 = scalar_select 0, %s6, %s4
  // Predicated region
  $region2: #{down_forward.3} parent=0 // pred_check
    _
  $region3: #{down_forward.3} parent=0 // pred_check_branch
    %9 = sbr.rel (0) target = $region5
  $region4: #{down_forward.3} parent=0 // pred_region
    _
  $region5: #{down_forward.3} parent=0 // pred_fallthru
    _
  // Predicated region
  $region6: #{down_forward.3} parent=0 // pred_check
    _
  $region7: #{down_forward.3} parent=0 // pred_check_branch
    %11 = sbr.rel (0) target = $region9
  $region8: #{down_forward.3} parent=0 // pred_region
    _
  $region9: #{down_forward.3} parent=0 // pred_fallthru
    _
  // Predicated region
  $region10: #{down_forward.3} parent=0 // pred_check
    _
  $region11: #{down_forward.3} parent=0 // pred_check_branch
    %13 = sbr.rel (0) target = $region13
  $region12: #{down_forward.3} parent=0 // pred_region
    _
  $region13: #{down_forward.3} parent=0 // pred_fallthru
    _
  %v14 = vld [vmem:[%s1] sm:$0xff]
  %v15 = vld [vmem:[%s0] sm:$0xff]
  %v16 = vld [vmem:[%s0 + $0x8] sm:$0xff]
  %v17 = vld [vmem:[%s0 + $0x10] sm:$0xff]
  %v18 = vld [vmem:[%s0 + $0x18] sm:$0xff]
  %v19 = vld [vmem:[%s0 + $0x20] sm:$0xff]
  %v20 = vld [vmem:[%s0 + $0x28] sm:$0xff]
  %v21 = vld [vmem:[%s0 + $0x30] sm:$0xff]
  %v22 = vld [vmem:[%s0 + $0x38] sm:$0xff]
  %v23 = vld [vmem:[%s0 + $0x40] sm:$0xff]
  %v24 = vld [vmem:[%s2] sm:$0xff]
  %26 = vset.pattern.permute.xlu0 0
  %27 = vperm.xlu0 %26, %v24
  %v28 = vpop.permute.xlu0 %27
  %vm30 = vcmask 588800
  %v32 = vsel %vm30, %v14, 0
  %34 = vmatprep.subr.mxu0 0.0
  %35 = vmatpush1.msra.mxu0 0.0
  %36 = vmatprep.subr.mxu0 0.0
  %37 = vmatpush1.msra.mxu0 0.0
  %38 = vmatprep.subr.mxu0 0.0
  %39 = vmatpush1.msra.mxu0 0.0
  %40 = vmatprep.subr.mxu0 0.0
  %41 = vmatpush1.msra.mxu0 0.0
  %42 = vmatprep.subr.mxu0 0.0
  %43 = vmatpush1.msra.mxu0 0.0
  %44 = vmatprep.subr.mxu0 0.0
  %45 = vmatpush1.msra.mxu0 0.0
  %46 = vmatprep.subr.mxu0 0.0
  %47 = vmatpush1.msra.mxu0 0.0
  %48 = vmatprep.subr.mxu0 0.0
  %49 = vmatpush1.msra.mxu0 %v23
  %50 = vmatprep.subr.mxu0 0.0
  %51 = vmatpush1.msra.mxu0 %v22
  %52 = vmatprep.subr.mxu0 0.0
  %53 = vmatpush1.msra.mxu0 %v21
  %54 = vmatprep.subr.mxu0 0.0
  %55 = vmatpush1.msra.mxu0 %v20
  %56 = vmatprep.subr.mxu0 0.0
  %57 = vmatpush1.msra.mxu0 %v19
  %58 = vmatprep.subr.mxu0 0.0
  %59 = vmatpush1.msra.mxu0 %v18
  %60 = vmatprep.subr.mxu0 0.0
  %61 = vmatpush1.msra.mxu0 %v17
  %62 = vmatprep.subr.mxu0 0.0
  %63 = vmatpush1.msra.mxu0 %v16
  %64 = vmatprep.subr.mxu0 0.0
  %65 = vmatpush1.msra.mxu0 %v15
  %66 = vmatprep.subr.mxu0 0.0
  %67 = vmatpush2.msra.mxu0 0.0
  %68 = vmatprep.subr.mxu0 0.0
  %69 = vmatpush2.msra.mxu0 0.0
  %70 = vmatprep.subr.mxu0 0.0
  %71 = vmatpush2.msra.mxu0 0.0
  %72 = vmatprep.subr.mxu0 0.0
  %73 = vmatpush2.msra.mxu0 0.0
  %74 = vmatprep.subr.mxu0 0.0
  %75 = vmatpush2.msra.mxu0 0.0
  %76 = vmatprep.subr.mxu0 0.0
  %77 = vmatpush2.msra.mxu0 0.0
  %78 = vmatprep.subr.mxu0 0.0
  %79 = vmatpush2.msra.mxu0 0.0
  %80 = vmatprep.subr.mxu0 0.0
  %81 = vmatpush2.msra.mxu0 0.0
  %82 = vmatprep.subr.mxu0 0.0
  %83 = vmatpush2.msra.mxu0 0.0
  %84 = vmatprep.subr.mxu0 0.0
  %85 = vmatpush2.msra.mxu0 0.0
  %86 = vmatprep.subr.mxu0 0.0
  %87 = vmatpush2.msra.mxu0 0.0
  %88 = vmatprep.subr.mxu0 0.0
  %89 = vmatpush2.msra.mxu0 0.0
  %90 = vmatprep.subr.mxu0 0.0
  %91 = vmatpush2.msra.mxu0 0.0
  %92 = vmatprep.subr.mxu0 0.0
  %93 = vmatpush2.msra.mxu0 0.0
  %94 = vmatprep.subr.mxu0 0.0
  %95 = vmatpush2.msra.mxu0 0.0
  %96 = vmatprep.subr.mxu0 0.0
  %97 = vmatpush2.msra.mxu0 0.0
  %98 = vmatprep.mubr.f32.mxu0 0.0
  %99 = vmatmul.mubr.f32.gmra.mxu0 %v32
  %v100 = vpop.f32.mrf.mxu0
  %v101 = vadd.f32 %v28, %v100
  %v102 = vpop.f32.mrf.mxu0
  %103 = vdwg.mxu0
  %v104 = vmax.f32 %v101, 0.0
  %105 = vst [vmem:[%s3] sm:$0xff] %v104
  // Predicated region
  $region14: #{down_forward.3} parent=0 // pred_check
    _
  $region15: #{down_forward.3} parent=0 // pred_check_branch
    %107 = sbr.rel (0) target = $region17
  $region16: #{down_forward.3} parent=0 // pred_region
    _
  $region17: #{down_forward.3} parent=0 // pred_fallthru
    _
  // Predicated region
  $region18: #{down_forward.3} parent=0 // pred_check
    _
  $region19: #{down_forward.3} parent=0 // pred_check_branch
    %109 = sbr.rel (0) target = $region21
  $region20: #{down_forward.3} parent=0 // pred_region
    _
  $region21: #{down_forward.3} parent=0 // pred_fallthru
    _

</llo_original>
